<compile_context>
chip_gen: v7x
topology: tpu7x:2x2x1
jax: 0.10.0
libtpu: 0.0.40
codegen_flags: <defaults>
</compile_context>

<pallas_src>
import jax
import jax.numpy as jnp
from jax import lax
from jax.experimental import pallas as pl
from jax.experimental.pallas import tpu as pltpu

KH = KW = 4
STRIDE = 2
PAD = 1
BN_EPS = 1e-5
COMPUTE_DTYPE = jnp.bfloat16   # MXU operand dtype; accumulation is f32


def _round_up(x, m):
    return (x + m - 1) // m * m


def _gemm_stats_kernel(w_ref, p_ref, conv_ref, ssum_ref, ssq_ref):
    # w_ref: (C_pad, K) bf16      p_ref: (K, tile_m) bf16
    # conv_ref: (C_pad, tile_m) f32 (lane-dense), ssum/ssq: (1, C_pad, 1) f32 per tile.
    acc = jnp.dot(w_ref[...], p_ref[...], preferred_element_type=jnp.float32)
    conv_ref[...] = acc
    ssum_ref[...] = jnp.sum(acc, axis=1, keepdims=True)[None, :, :]
    ssq_ref[...] = jnp.sum(acc * acc, axis=1, keepdims=True)[None, :, :]


def _bn_relu_kernel(conv_ref, scale_ref, shift_ref, o_ref):
    # conv_ref: (C_pad, tile_m) f32, scale/shift: (C_pad, 1) f32 broadcast over lanes.
    y = conv_ref[...] * scale_ref[...] + shift_ref[...]
    o_ref[...] = jnp.maximum(y, 0.0).astype(o_ref.dtype)


def _im2col_T(x, kh, kw, stride, pad):
    """x: (N, C, H, W) -> patchesT (C*kh*kw, N*OH*OW), rows in PyTorch weight order."""
    n, c, h, w = x.shape
    xp = jnp.pad(x, ((0, 0), (0, 0), (pad, pad), (pad, pad)))
    oh = (h + 2 * pad - kh) // stride + 1
    ow = (w + 2 * pad - kw) // stride + 1
    cols = []
    for i in range(kh):
        for j in range(kw):
            cols.append(xp[:, :, i:i + stride * oh:stride, j:j + stride * ow:stride])
    # (16, N, C, OH, OW) -> (C, 16, N, OH, OW): K index = c*16 + i*4 + j matches
    # weight.reshape(C_out, C_in*KH*KW); column index = n*OH*OW + oh*OW + ow.
    p = jnp.stack(cols, axis=0).transpose(2, 0, 1, 3, 4)
    return p.reshape(c * kh * kw, n * oh * ow), oh, ow


@jax.jit
def conv_block_forward(x, weight, bias, gamma, beta):
    """ConvBlock.forward.  x: (N, C_in, H, W), weight: (C_out, C_in, 4, 4)."""
    del bias  # per-channel conv bias is exactly cancelled by train-mode BN mean subtraction
    n, c_in, h, w = x.shape
    c_out = weight.shape[0]

    patches_t, oh, ow = _im2col_T(x, KH, KW, STRIDE, PAD)          # (K, M) f32
    k, m = patches_t.shape

    c_pad = _round_up(c_out, 8)
    m128 = _round_up(m, 128)
    # Biggest tile_m in [128, 1024] keeping double-buffered (patches + conv) tiles well
    # under the 32 MiB default scoped-VMEM limit (conservative for v7x's 64 MiB VMEM).
    tile_m = 1024
    while tile_m > 128 and 2 * tile_m * (k * 2 + c_pad * 4) > (24 << 20):
        tile_m //= 2
    tile_m = min(tile_m, m128)
    m_pad = _round_up(m, tile_m)
    num_tiles = m_pad // tile_m

    # Zero-padded columns/channels contribute 0 to the conv output and to the BN sums
    # (no bias term), so statistics divided by the true M stay exact.
    p16 = jnp.pad(patches_t, ((0, 0), (0, m_pad - m))).astype(COMPUTE_DTYPE)
    w2 = weight.reshape(c_out, c_in * KH * KW)
    w2 = jnp.pad(w2, ((0, c_pad - c_out), (0, 0))).astype(COMPUTE_DTYPE)

    gemm_flops = 2 * c_pad * k * m_pad
    gemm_bytes = (p16.size * 2 + w2.size * 2 + c_pad * m_pad * 4
                  + 2 * num_tiles * c_pad * 4)

    # ---- Pass 1: tiled GEMM + per-tile BN partial sums ------------------------------
    conv, ssum, ssq = pl.pallas_call(
        _gemm_stats_kernel,
        out_shape=[
            jax.ShapeDtypeStruct((c_pad, m_pad), jnp.float32),
            jax.ShapeDtypeStruct((num_tiles, c_pad, 1), jnp.float32),
            jax.ShapeDtypeStruct((num_tiles, c_pad, 1), jnp.float32),
        ],
        grid=(num_tiles,),
        in_specs=[
            pl.BlockSpec((c_pad, k), lambda i: (0, 0)),            # weights, resident
            pl.BlockSpec((k, tile_m), lambda i: (0, i)),           # patch tile
        ],
        out_specs=[
            pl.BlockSpec((c_pad, tile_m), lambda i: (0, i)),       # conv tile
            pl.BlockSpec((1, c_pad, 1), lambda i: (i, 0, 0)),      # per-tile sum
            pl.BlockSpec((1, c_pad, 1), lambda i: (i, 0, 0)),      # per-tile sumsq
        ],
        compiler_params=pltpu.CompilerParams(
            dimension_semantics=("parallel",)),
        cost_estimate=pl.CostEstimate(
            flops=gemm_flops, transcendentals=0, bytes_accessed=gemm_bytes),
    )(w2, p16)

    # ---- Tiny per-channel stat reduction + BN affine (outside the kernel) -----------
    count = jnp.float32(m)
    mean = jnp.sum(ssum, axis=0)[:, 0] / count                     # (C_pad,)
    var = jnp.maximum(jnp.sum(ssq, axis=0)[:, 0] / count - mean * mean, 0.0)
    inv = lax.rsqrt(var + BN_EPS)
    gamma_p = jnp.pad(gamma.astype(jnp.float32), (0, c_pad - c_out))
    beta_p = jnp.pad(beta.astype(jnp.float32), (0, c_pad - c_out))
    scale = (gamma_p * inv).reshape(c_pad, 1)
    shift = (beta_p - mean * gamma_p * inv).reshape(c_pad, 1)

    # ---- Pass 2: tiled normalize + ReLU ----------------------------------------------
    out = pl.pallas_call(
        _bn_relu_kernel,
        out_shape=jax.ShapeDtypeStruct((c_pad, m_pad), jnp.float32),
        grid=(num_tiles,),
        in_specs=[
            pl.BlockSpec((c_pad, tile_m), lambda i: (0, i)),
            pl.BlockSpec((c_pad, 1), lambda i: (0, 0)),
            pl.BlockSpec((c_pad, 1), lambda i: (0, 0)),
        ],
        out_specs=pl.BlockSpec((c_pad, tile_m), lambda i: (0, i)),
        compiler_params=pltpu.CompilerParams(
            dimension_semantics=("parallel",)),
        cost_estimate=pl.CostEstimate(
            flops=2 * c_pad * m_pad, transcendentals=0,
            bytes_accessed=2 * c_pad * m_pad * 4),
    )(conv, scale, shift)

    # (C_pad, M_pad) -> (N, C_out, OH, OW); column index = n*OH*OW + oh*OW + ow.
    out = out[:c_out, :m].reshape(c_out, n, oh, ow)
    return out.transpose(1, 0, 2, 3)


def _reference(x, weight, bias, gamma, beta):
    """Pure-JAX reference with PyTorch ConvBlock semantics (conv operands cast to the
    same bf16 compute dtype as the kernel, f32 accumulation, f32 BN math)."""
    y = lax.conv_general_dilated(
        x.astype(COMPUTE_DTYPE), weight.astype(COMPUTE_DTYPE),
        window_strides=(STRIDE, STRIDE), padding=((PAD, PAD), (PAD, PAD)),
        dimension_numbers=("NCHW", "OIHW", "NCHW"),
        preferred_element_type=jnp.float32)
    y = y + bias.reshape(1, -1, 1, 1)   # kept here; cancelled by train-mode BN below
    mean = jnp.mean(y, axis=(0, 2, 3), keepdims=True)
    var = jnp.mean((y - mean) ** 2, axis=(0, 2, 3), keepdims=True)
    y = (y - mean) * lax.rsqrt(var + BN_EPS)
    y = y * gamma.reshape(1, -1, 1, 1) + beta.reshape(1, -1, 1, 1)
    return jnp.maximum(y, 0.0)


if __name__ == "__main__":
    # Small shapes consistent with ConvBlock(in_c=4, out_c=8) on a 16x16 input.
    N, C_IN, C_OUT, H, W = 2, 4, 8, 16, 16

    key = jax.random.PRNGKey(0)
    kx, kw, kb, kg, kbe = jax.random.split(key, 5)
    x = jax.random.normal(kx, (N, C_IN, H, W), dtype=jnp.float32)
    weight = jax.random.normal(kw, (C_OUT, C_IN, KH, KW), dtype=jnp.float32) * 0.1
    bias = jax.random.normal(kb, (C_OUT,), dtype=jnp.float32) * 0.1
    gamma = jnp.ones((C_OUT,), dtype=jnp.float32) + 0.1 * jax.random.normal(
        kg, (C_OUT,), dtype=jnp.float32)
    beta = 0.1 * jax.random.normal(kbe, (C_OUT,), dtype=jnp.float32)

    out = conv_block_forward(x, weight, bias, gamma, beta)
    out = jax.block_until_ready(out)

    ref = jax.block_until_ready(_reference(x, weight, bias, gamma, beta))
    assert out.shape == (N, C_OUT, H // 2, W // 2), out.shape
    assert jnp.allclose(out, ref, atol=1e-3, rtol=1e-3), \
        float(jnp.max(jnp.abs(out - ref)))

    print("KERNEL_OK")
</pallas_src>

<mosaic_0001>
module attributes {stable_mosaic.version = 11 : i64} {
  func.func @_gemm_stats_kernel(%arg0: i32, %arg1: memref<8x64xbf16, #tpu.memory_space<vmem>>, %arg2: memref<64x128xbf16, #tpu.memory_space<vmem>>, %arg3: memref<8x128xf32, #tpu.memory_space<vmem>>, %arg4: memref<1x8x1xf32, #tpu.memory_space<vmem>>, %arg5: memref<1x8x1xf32, #tpu.memory_space<vmem>>) attributes {dimension_semantics = [#tpu.dimension_semantics<parallel>], iteration_bounds = array<i64: 1>, scalar_prefetch = 0 : i64, scratch_operands = 0 : i64, tpu.core_type = #tpu.core_type<tc>, window_params = [{pipeline_mode = #tpu.pipeline_mode<synchronous>, transform_indices = @transform_0, window_bounds = array<i64: 8, 64>}, {transform_indices = @transform_1, window_bounds = array<i64: 64, 128>}, {transform_indices = @transform_2, window_bounds = array<i64: 8, 128>}, {transform_indices = @transform_3, window_bounds = array<i64: 1, 8, 1>}, {transform_indices = @transform_4, window_bounds = array<i64: 1, 8, 1>}]} {
    %c0 = arith.constant 0 : index
    %c0_0 = arith.constant 0 : index
    %0 = vector.load %arg1[%c0, %c0_0] : memref<8x64xbf16, #tpu.memory_space<vmem>>, vector<8x64xbf16>
    %c0_1 = arith.constant 0 : index
    %c0_2 = arith.constant 0 : index
    %1 = vector.load %arg2[%c0_1, %c0_2] : memref<64x128xbf16, #tpu.memory_space<vmem>>, vector<64x128xbf16>
    %cst = arith.constant dense<0.000000e+00> : vector<8x128xf32>
    %2 = tpu.matmul %0, %1, %cst {dimension_numbers = #tpu.dot_dimension_numbers<[1], [0], [0], [1], [0, 0, 1, 1], [], []>} : vector<8x64xbf16>, vector<64x128xbf16>, vector<8x128xf32> -> vector<8x128xf32>
    %c0_3 = arith.constant 0 : index
    %c0_4 = arith.constant 0 : index
    %3 = vector.load %arg3[%c0_3, %c0_4] : memref<8x128xf32, #tpu.memory_space<vmem>>, vector<8x128xf32>
    tpu.vector_store %arg3[%c0_3, %c0_4], %2 {strides = array<i32>} : memref<8x128xf32, #tpu.memory_space<vmem>>, vector<8x128xf32>,
    %cst_5 = arith.constant dense<0.000000e+00> : vector<8xf32>
    %4 = vector.multi_reduction <add>, %2, %cst_5 [1] : vector<8x128xf32> to vector<8xf32>
    %5 = vector.shape_cast %4 : vector<8xf32> to vector<8x1xf32>
    %6 = vector.shape_cast %5 : vector<8x1xf32> to vector<1x8x1xf32>
    %c0_6 = arith.constant 0 : index
    %c0_7 = arith.constant 0 : index
    %c0_8 = arith.constant 0 : index
    %7 = vector.load %arg4[%c0_6, %c0_7, %c0_8] : memref<1x8x1xf32, #tpu.memory_space<vmem>>, vector<1x8x1xf32>
    tpu.vector_store %arg4[%c0_6, %c0_7, %c0_8], %6 {strides = array<i32>} : memref<1x8x1xf32, #tpu.memory_space<vmem>>, vector<1x8x1xf32>,
    %8 = arith.mulf %2, %2 : vector<8x128xf32>
    %cst_9 = arith.constant dense<0.000000e+00> : vector<8xf32>
    %9 = vector.multi_reduction <add>, %8, %cst_9 [1] : vector<8x128xf32> to vector<8xf32>
    %10 = vector.shape_cast %9 : vector<8xf32> to vector<8x1xf32>
    %11 = vector.shape_cast %10 : vector<8x1xf32> to vector<1x8x1xf32>
    %c0_10 = arith.constant 0 : index
    %c0_11 = arith.constant 0 : index
    %c0_12 = arith.constant 0 : index
    %12 = vector.load %arg5[%c0_10, %c0_11, %c0_12] : memref<1x8x1xf32, #tpu.memory_space<vmem>>, vector<1x8x1xf32>
    tpu.vector_store %arg5[%c0_10, %c0_11, %c0_12], %11 {strides = array<i32>} : memref<1x8x1xf32, #tpu.memory_space<vmem>>, vector<1x8x1xf32>,
    return
  }
  func.func @transform_0(%arg0: i32) -> (i32, i32) {
    %c0_i32 = arith.constant 0 : i32
    %c0_i32_0 = arith.constant 0 : i32
    %c0_i32_1 = arith.constant 0 : i32
    return %c0_i32, %c0_i32_0 : i32, i32
  }
  func.func @transform_1(%arg0: i32) -> (i32, i32) {
    %c0_i32 = arith.constant 0 : i32
    %c0_i32_0 = arith.constant 0 : i32
    return %c0_i32, %arg0 : i32, i32
  }
  func.func @transform_2(%arg0: i32) -> (i32, i32) {
    %c0_i32 = arith.constant 0 : i32
    %c0_i32_0 = arith.constant 0 : i32
    return %c0_i32, %arg0 : i32, i32
  }
  func.func @transform_3(%arg0: i32) -> (i32, i32, i32) {
    %c0_i32 = arith.constant 0 : i32
    %c0_i32_0 = arith.constant 0 : i32
    %c0_i32_1 = arith.constant 0 : i32
    return %arg0, %c0_i32, %c0_i32_0 : i32, i32, i32
  }
  func.func @transform_4(%arg0: i32) -> (i32, i32, i32) {
    %c0_i32 = arith.constant 0 : i32
    %c0_i32_0 = arith.constant 0 : i32
    %c0_i32_1 = arith.constant 0 : i32
    return %arg0, %c0_i32, %c0_i32_0 : i32, i32, i32
  }
}

module attributes {stable_mosaic.version = 11 : i64} {
  func.func @_bn_relu_kernel(%arg0: i32, %arg1: memref<8x128xf32, #tpu.memory_space<vmem>>, %arg2: memref<8x1xf32, #tpu.memory_space<vmem>>, %arg3: memref<8x1xf32, #tpu.memory_space<vmem>>, %arg4: memref<8x128xf32, #tpu.memory_space<vmem>>) attributes {dimension_semantics = [#tpu.dimension_semantics<parallel>], iteration_bounds = array<i64: 1>, scalar_prefetch = 0 : i64, scratch_operands = 0 : i64, tpu.core_type = #tpu.core_type<tc>, window_params = [{transform_indices = @transform_0, window_bounds = array<i64: 8, 128>}, {pipeline_mode = #tpu.pipeline_mode<synchronous>, transform_indices = @transform_1, window_bounds = array<i64: 8, 1>}, {pipeline_mode = #tpu.pipeline_mode<synchronous>, transform_indices = @transform_2, window_bounds = array<i64: 8, 1>}, {transform_indices = @transform_3, window_bounds = array<i64: 8, 128>}]} {
    %c0 = arith.constant 0 : index
    %c0_0 = arith.constant 0 : index
    %0 = vector.load %arg1[%c0, %c0_0] : memref<8x128xf32, #tpu.memory_space<vmem>>, vector<8x128xf32>
    %c0_1 = arith.constant 0 : index
    %c0_2 = arith.constant 0 : index
    %1 = vector.load %arg2[%c0_1, %c0_2] : memref<8x1xf32, #tpu.memory_space<vmem>>, vector<8x1xf32>
    %2 = vector.broadcast %1 : vector<8x1xf32> to vector<8x128xf32>
    %3 = arith.mulf %0, %2 : vector<8x128xf32>
    %c0_3 = arith.constant 0 : index
    %c0_4 = arith.constant 0 : index
    %4 = vector.load %arg3[%c0_3, %c0_4] : memref<8x1xf32, #tpu.memory_space<vmem>>, vector<8x1xf32>
    %5 = vector.broadcast %4 : vector<8x1xf32> to vector<8x128xf32>
    %6 = arith.addf %3, %5 : vector<8x128xf32>
    %cst = arith.constant 0.000000e+00 : f32
    %7 = vector.broadcast %cst : f32 to vector<8x128xf32>
    %8 = arith.maximumf %6, %7 : vector<8x128xf32>
    %c0_5 = arith.constant 0 : index
    %c0_6 = arith.constant 0 : index
    %9 = vector.load %arg4[%c0_5, %c0_6] : memref<8x128xf32, #tpu.memory_space<vmem>>, vector<8x128xf32>
    tpu.vector_store %arg4[%c0_5, %c0_6], %8 {strides = array<i32>} : memref<8x128xf32, #tpu.memory_space<vmem>>, vector<8x128xf32>,
    return
  }
  func.func @transform_0(%arg0: i32) -> (i32, i32) {
    %c0_i32 = arith.constant 0 : i32
    %c0_i32_0 = arith.constant 0 : i32
    return %c0_i32, %arg0 : i32, i32
  }
  func.func @transform_1(%arg0: i32) -> (i32, i32) {
    %c0_i32 = arith.constant 0 : i32
    %c0_i32_0 = arith.constant 0 : i32
    %c0_i32_1 = arith.constant 0 : i32
    return %c0_i32, %c0_i32_0 : i32, i32
  }
  func.func @transform_2(%arg0: i32) -> (i32, i32) {
    %c0_i32 = arith.constant 0 : i32
    %c0_i32_0 = arith.constant 0 : i32
    %c0_i32_1 = arith.constant 0 : i32
    return %c0_i32, %c0_i32_0 : i32, i32
  }
  func.func @transform_3(%arg0: i32) -> (i32, i32) {
    %c0_i32 = arith.constant 0 : i32
    %c0_i32_0 = arith.constant 0 : i32
    return %c0_i32, %arg0 : i32, i32
  }
}

</mosaic_0001>

<llo_original>
// kernel: conv_block_forward.3
$region0: #{conv_block_forward.3}
  #allocation0 [shape = 'u32[]', space=smem, size = 0x4, offset = 0x4, fixed_abs, tag = 'smem constant byte address 0x4 - core index']
  #allocation1 [shape = 'u32[144,128]{1,0:T(1,128)}', space=vmem, size = 0x12000, scoped, tag = 'internal scratch']
  %s0 = inlined_call_operand.vmem [shape: f32[8,128], index: 0, kind: input, shape index: {}]
  %s1 = inlined_call_operand.vmem [shape: f32[8,1], index: 1, kind: input, shape index: {}]
  %s2 = inlined_call_operand.vmem [shape: f32[8,1], index: 2, kind: input, shape index: {}]
  %s3 = inlined_call_operand.vmem [shape: f32[8,128], index: 3, kind: output, shape index: {}]
  %s4 = sld [smem:[#allocation0]]
  $region22: #{conv_block_forward.3} parent=0
    _
  %s6 = ssub.s32 1, %s4
  %s7 = scalar_select 0, %s6, %s4
  // Predicated region
  $region2: #{conv_block_forward.3} parent=0 // pred_check
    _
  $region3: #{conv_block_forward.3} parent=0 // pred_check_branch
    %9 = sbr.rel (0) target = $region5
  $region4: #{conv_block_forward.3} parent=0 // pred_region
    _
  $region5: #{conv_block_forward.3} parent=0 // pred_fallthru
    _
  // Predicated region
  $region6: #{conv_block_forward.3} parent=0 // pred_check
    _
  $region7: #{conv_block_forward.3} parent=0 // pred_check_branch
    %11 = sbr.rel (0) target = $region9
  $region8: #{conv_block_forward.3} parent=0 // pred_region
    _
  $region9: #{conv_block_forward.3} parent=0 // pred_fallthru
    _
  // Predicated region
  $region10: #{conv_block_forward.3} parent=0 // pred_check
    _
  $region11: #{conv_block_forward.3} parent=0 // pred_check_branch
    %13 = sbr.rel (0) target = $region13
  $region12: #{conv_block_forward.3} parent=0 // pred_region
    _
  $region13: #{conv_block_forward.3} parent=0 // pred_fallthru
    _
  %v14 = vld [vmem:[%s0] sm:$0xff]
  %v15 = vld [vmem:[%s1] sm:$0xff]
  %17 = vset.pattern.permute.xlu0 0
  %18 = vperm.xlu0 %17, %v15
  %v19 = vpop.permute.xlu0 %18
  %v21 = vmul.f32 %v14, %v19
  %v22 = vld [vmem:[%s2] sm:$0xff]
  %24 = vset.pattern.permute.xlu0 0
  %25 = vperm.xlu0 %24, %v22
  %v26 = vpop.permute.xlu0 %25
  %v28 = vadd.f32 %v21, %v26
  %v29 = vmax.f32 %v28, 0.0
  %30 = vst [vmem:[%s3] sm:$0xff] %v29
  // Predicated region
  $region14: #{conv_block_forward.3} parent=0 // pred_check
    _
  $region15: #{conv_block_forward.3} parent=0 // pred_check_branch
    %32 = sbr.rel (0) target = $region17
  $region16: #{conv_block_forward.3} parent=0 // pred_region
    _
  $region17: #{conv_block_forward.3} parent=0 // pred_fallthru
    _
  // Predicated region
  $region18: #{conv_block_forward.3} parent=0 // pred_check
    _
  $region19: #{conv_block_forward.3} parent=0 // pred_check_branch
    %34 = sbr.rel (0) target = $region21
  $region20: #{conv_block_forward.3} parent=0 // pred_region
    _
  $region21: #{conv_block_forward.3} parent=0 // pred_fallthru
    _

// kernel: conv_block_forward.2
$region0: #{conv_block_forward.2}
  #allocation0 [shape = 'u32[]', space=smem, size = 0x4, offset = 0x4, fixed_abs, tag = 'smem constant byte address 0x4 - core index']
  #allocation1 [shape = 'u32[144,128]{1,0:T(1,128)}', space=vmem, size = 0x12000, scoped, tag = 'internal scratch']
  %s0 = inlined_call_operand.vmem [shape: bf16[8,64], index: 0, kind: input, shape index: {}]
  %s1 = inlined_call_operand.vmem [shape: bf16[64,128], index: 1, kind: input, shape index: {}]
  %s2 = inlined_call_operand.vmem [shape: f32[8,128], index: 2, kind: output, shape index: {0}]
  %s3 = inlined_call_operand.vmem [shape: f32[1,8,1], index: 3, kind: output, shape index: {1}]
  %s4 = inlined_call_operand.vmem [shape: f32[1,8,1], index: 4, kind: output, shape index: {2}]
  %5 = xla_tuple %s2, %s3, %s4
  %s6 = sld [smem:[#allocation0]]
  $region34: #{conv_block_forward.2} parent=0
    _
  %s8 = ssub.s32 1, %s6
  %s9 = scalar_select 0, %s8, %s6
  // Predicated region
  $region2: #{conv_block_forward.2} parent=0 // pred_check
    _
  $region3: #{conv_block_forward.2} parent=0 // pred_check_branch
    %11 = sbr.rel (0) target = $region5
  $region4: #{conv_block_forward.2} parent=0 // pred_region
    _
  $region5: #{conv_block_forward.2} parent=0 // pred_fallthru
    _
  // Predicated region
  $region6: #{conv_block_forward.2} parent=0 // pred_check
    _
  $region7: #{conv_block_forward.2} parent=0 // pred_check_branch
    %13 = sbr.rel (0) target = $region9
  $region8: #{conv_block_forward.2} parent=0 // pred_region
    _
  $region9: #{conv_block_forward.2} parent=0 // pred_fallthru
    _
  %v15 = vld [vmem:[%s0] sm:$0xf]
  %v16 = vld [vmem:[%s1] sm:$0xf]
  %v17 = vld [vmem:[%s1 + $0x4] sm:$0xf]
  %v18 = vld [vmem:[%s1 + $0x8] sm:$0xf]
  %v19 = vld [vmem:[%s1 + $0xc] sm:$0xf]
  %v20 = vld [vmem:[%s1 + $0x10] sm:$0xf]
  %v21 = vld [vmem:[%s1 + $0x14] sm:$0xf]
  %v22 = vld [vmem:[%s1 + $0x18] sm:$0xf]
  %v23 = vld [vmem:[%s1 + $0x1c] sm:$0xf]
  %v32 = vunpack.c.l.b16 %v16
  %v33 = vunpack.c.l.b16 %v17
  %v34 = vunpack.c.l.b16 %v18
  %v35 = vunpack.c.l.b16 %v19
  %v36 = vunpack.c.l.b16 %v20
  %v37 = vunpack.c.l.b16 %v21
  %v38 = vunpack.c.l.b16 %v22
  %v39 = vunpack.c.l.b16 %v23
  %v40 = vpack.c.b16 %v33, %v32
  %v41 = vpack.c.b16 %v35, %v34
  %v42 = vpack.c.b16 %v37, %v36
  %v43 = vpack.c.b16 %v39, %v38
  %vm48 = vcmask 523264
  %v50 = vsel %vm48, %v15, 0
  %52 = vmatprep.subr.bf16.mxu0 0
  %53 = vmatpush1.bf16.msra.mxu0 %v40
  %54 = vmatprep.subr.bf16.mxu0 0
  %55 = vmatpush1.bf16.msra.mxu0 %v41
  %56 = vmatprep.subr.bf16.mxu0 0
  %57 = vmatpush1.bf16.msra.mxu0 %v42
  %58 = vmatprep.subr.bf16.mxu0 0
  %59 = vmatpush1.bf16.msra.mxu0 %v43
  %60 = vmatprep.subr.bf16.mxu0 0
  %61 = vmatpush1.bf16.msra.mxu0 0
  %62 = vmatprep.subr.bf16.mxu0 0
  %63 = vmatpush1.bf16.msra.mxu0 0
  %64 = vmatprep.subr.bf16.mxu0 0
  %65 = vmatpush1.bf16.msra.mxu0 0
  %66 = vmatprep.subr.bf16.mxu0 0
  %67 = vmatpush1.bf16.msra.mxu0 0
  %68 = vmatprep.subr.bf16.mxu0 0
  %69 = vmatpush1.bf16.msra.mxu0 0
  %70 = vmatprep.subr.bf16.mxu0 0
  %71 = vmatpush1.bf16.msra.mxu0 0
  %72 = vmatprep.subr.bf16.mxu0 0
  %73 = vmatpush1.bf16.msra.mxu0 0
  %74 = vmatprep.subr.bf16.mxu0 0
  %75 = vmatpush1.bf16.msra.mxu0 0
  %76 = vmatprep.subr.bf16.mxu0 0
  %77 = vmatpush1.bf16.msra.mxu0 0
  %78 = vmatprep.subr.bf16.mxu0 0
  %79 = vmatpush1.bf16.msra.mxu0 0
  %80 = vmatprep.subr.bf16.mxu0 0
  %81 = vmatpush1.bf16.msra.mxu0 0
  %82 = vmatprep.subr.bf16.mxu0 0
  %83 = vmatpush1.bf16.msra.mxu0 0
  %84 = vmatprep.mubr.bf16.mxu0 0
  %85 = vmatmul.mubr.bf16.gmra.mrb[0].mxu0 %v50
  %v86 = vpop.f32.mrb[0].mxu0
  %v87 = vadd.f32 0.0, %v86
  %v88 = vpop.f32.mrb[0].mxu0
  %v89 = vpop.f32.mrb[0].mxu0
  %v90 = vpop.f32.mrb[0].mxu0
  %91 = vdwg.mxu0
  %92 = vst [vmem:[%s2] sm:$0xff] %v87
  %93 = vadd.xlane.f32.xlu0 %v87
  %v94 = vpop.xlane.xlu0 %93
  %vm95 = vcmask 7168
  %96 = vst.msk [vmem:[%s3] sm:$0xff] %vm95, %v94
  %v97 = vmul.f32 %v87, %v87
  %98 = vadd.xlane.f32.xlu0 %v97
  %v99 = vpop.xlane.xlu0 %98
  %100 = vst.msk [vmem:[%s4] sm:$0xff] %vm95, %v99
  // Predicated region
  $region10: #{conv_block_forward.2} parent=0 // pred_check
    _
  $region11: #{conv_block_forward.2} parent=0 // pred_check_branch
    %102 = sbr.rel (0) target = $region13
  $region12: #{conv_block_forward.2} parent=0 // pred_region
    _
  $region13: #{conv_block_forward.2} parent=0 // pred_fallthru
    _
  // Predicated region
  $region14: #{conv_block_forward.2} parent=0 // pred_check
    _
  $region15: #{conv_block_forward.2} parent=0 // pred_check_branch
    %104 = sbr.rel (0) target = $region17
  $region16: #{conv_block_forward.2} parent=0 // pred_region
    _
  $region17: #{conv_block_forward.2} parent=0 // pred_fallthru
    _
  // Predicated region
  $region18: #{conv_block_forward.2} parent=0 // pred_check
    _
  $region19: #{conv_block_forward.2} parent=0 // pred_check_branch
    %106 = sbr.rel (0) target = $region21
  $region20: #{conv_block_forward.2} parent=0 // pred_region
    _
  $region21: #{conv_block_forward.2} parent=0 // pred_fallthru
    _
  // Predicated region
  $region22: #{conv_block_forward.2} parent=0 // pred_check
    _
  $region23: #{conv_block_forward.2} parent=0 // pred_check_branch
    %108 = sbr.rel (0) target = $region25
  $region24: #{conv_block_forward.2} parent=0 // pred_region
    _
  $region25: #{conv_block_forward.2} parent=0 // pred_fallthru
    _
  // Predicated region
  $region26: #{conv_block_forward.2} parent=0 // pred_check
    _
  $region27: #{conv_block_forward.2} parent=0 // pred_check_branch
    %110 = sbr.rel (0) target = $region29
  $region28: #{conv_block_forward.2} parent=0 // pred_region
    _
  $region29: #{conv_block_forward.2} parent=0 // pred_fallthru
    _
  // Predicated region
  $region30: #{conv_block_forward.2} parent=0 // pred_check
    _
  $region31: #{conv_block_forward.2} parent=0 // pred_check_branch
    %112 = sbr.rel (0) target = $region33
  $region32: #{conv_block_forward.2} parent=0 // pred_region
    _
  $region33: #{conv_block_forward.2} parent=0 // pred_fallthru
    _

</llo_original>
